<compile_context>
chip_gen: v7x
topology: tpu7x:2x2x1
jax: 0.10.0
libtpu: 0.0.40
codegen_flags: <defaults>
</compile_context>

<pallas_src>
import jax
import jax.numpy as jnp
from jax.experimental import pallas as pl
from jax.experimental.pallas import tpu as pltpu

_LANES = 128
_SUBLANES = 8
_CHUNK = _SUBLANES * _LANES          # 1024 elements = one native (8,128) tile
_SMALL_N = 1 << 16                   # below this, plain XLA beats any dispatch


def _device_kind() -> str:
    try:
        return jax.devices()[0].device_kind.lower()
    except Exception:
        return ""


_IS_V7 = "v7" in _device_kind()
# v7x: 2 TensorCores/chip sharing ~3.2 TB/s -> split the stream, bigger tiles.
# v5e/v6e: single TC; 2048-row tiles already sit near the HBM roofline and fit
# the default scoped VMEM.
_NCORES_HW = 2 if _IS_V7 else 1
_MAX_BLOCK_ROWS = 4096 if _IS_V7 else 2048


def _round_up(a, b):
    return ((a + b - 1) // b) * b


def _make_mse_kernel(block_rows, steps, rows_valid, need_mask, has_core_axis):
    """Per grid step: load one (block_rows, 128) tile of x and target, compute
    (x - t)^2 in f32, reduce it to an (8, 128) partial (cross-vreg VALU adds),
    and accumulate into the resident per-core output block.  Only the last
    block may be partial; its out-of-bounds rows are zeroed by a VPU iota
    mask (compiled in only when needed)."""
    n_sub = block_rows // _SUBLANES

    def kernel(x_ref, t_ref, out_ref):
        if has_core_axis:
            c = pl.program_id(0)
            s = pl.program_id(1)
            blk = c * steps + s
        else:
            s = pl.program_id(0)
            blk = s

        d = x_ref[...].astype(jnp.float32) - t_ref[...].astype(jnp.float32)
        sq = d * d

        if need_mask:
            local_row = jax.lax.broadcasted_iota(jnp.int32, (block_rows, _LANES), 0)
            global_row = blk * block_rows + local_row
            sq = jnp.where(global_row < rows_valid, sq, 0.0)

        # (block_rows,128) -> (n_sub,8,128) keeps native (8,128) tiles; the sum
        # over the untiled leading axis is pure elementwise vreg adds (no XLU).
        partial = sq.reshape(n_sub, _SUBLANES, _LANES).sum(axis=0)
        partial = partial.reshape(out_ref.shape)

        @pl.when(s == 0)
        def _():
            out_ref[...] = partial

        @pl.when(s != 0)
        def _():
            out_ref[...] += partial

    return kernel


def _mse_sum_pallas(x2d, t2d, rows, itemsize):
    """Sum of (x - t)^2 over a (rows, 128) slab; rows is a multiple of 8."""
    ncores = _NCORES_HW
    block_rows = min(_MAX_BLOCK_ROWS, rows)
    total_blocks = pl.cdiv(rows, block_rows)

    if ncores == 2:
        if total_blocks % 2 != 0:
            if total_blocks > 2:
                # Re-pick block_rows so the block count is even: both cores
                # stay balanced and there is no clamped / duplicate block DMA.
                steps_total = total_blocks + 1
                br2 = _round_up(pl.cdiv(rows, steps_total), _SUBLANES)
                if (steps_total - 1) * br2 < rows:   # every block starts in-bounds
                    block_rows, total_blocks = br2, steps_total
                else:
                    ncores = 1
            else:
                ncores = 1
    steps = total_blocks // ncores
    # Only the last block can be partial; all block starts are in-bounds.
    need_mask = (ncores * steps * block_rows) != rows

    if ncores == 2:
        grid = (2, steps)
        in_idx = lambda c, s: (c * steps + s, 0)
        out_shape = jax.ShapeDtypeStruct((2, _SUBLANES, _LANES), jnp.float32)
        out_spec = pl.BlockSpec((1, _SUBLANES, _LANES), lambda c, s: (c, 0, 0))
        semantics = (pltpu.CORE_PARALLEL, pltpu.ARBITRARY)
    else:
        grid = (steps,)
        in_idx = lambda s: (s, 0)
        out_shape = jax.ShapeDtypeStruct((_SUBLANES, _LANES), jnp.float32)
        out_spec = pl.BlockSpec((_SUBLANES, _LANES), lambda s: (0, 0))
        semantics = (pltpu.ARBITRARY,)

    n_main = rows * _LANES
    cost = pl.CostEstimate(
        flops=3 * n_main,
        transcendentals=0,
        bytes_accessed=2 * n_main * itemsize + ncores * _SUBLANES * _LANES * 4,
    )
    # 2 inputs x double-buffered blocks; raise the scoped-VMEM limit only when
    # the footprint needs headroom (v7x 4096-row f32 tiles -> 16 MiB).
    in_block_bytes = 2 * 2 * block_rows * _LANES * itemsize
    vmem_limit = (48 * 1024 * 1024) if in_block_bytes > (8 << 20) else None

    partials = pl.pallas_call(
        _make_mse_kernel(block_rows, steps, rows, need_mask, ncores == 2),
        out_shape=out_shape,
        grid_spec=pltpu.PrefetchScalarGridSpec(
            num_scalar_prefetch=0,
            grid=grid,
            in_specs=[
                pl.BlockSpec((block_rows, _LANES), in_idx),
                pl.BlockSpec((block_rows, _LANES), in_idx),
            ],
            out_specs=out_spec,
        ),
        compiler_params=pltpu.CompilerParams(
            dimension_semantics=semantics,
            vmem_limit_bytes=vmem_limit,
        ),
        cost_estimate=cost,
    )(x2d, t2d)

    return jnp.sum(partials)


def content_loss_forward(x, target):
    """Mirrors ContentLoss.forward: loss = F.mse_loss(input, target) (mean
    reduction, f32 scalar); the input is returned unchanged."""
    assert x.shape == target.shape, "input / target shape mismatch"
    n = int(x.size)

    if n < _SMALL_N:
        # Primary ContentLoss feature maps are tiny; a fused XLA
        # elementwise+reduce beats any kernel dispatch overhead here.
        d = x.astype(jnp.float32) - target.astype(jnp.float32)
        return x, jnp.mean(d * d)

    x_flat = x.reshape(-1)
    t_flat = target.reshape(-1)
    n_main = (n // _CHUNK) * _CHUNK
    rows = n_main // _LANES                       # multiple of 8

    if n_main == n:
        x2d = x_flat.reshape(rows, _LANES)        # pure metadata reshape
        t2d = t_flat.reshape(rows, _LANES)
    else:
        # Ragged tail: kernel runs on the 1024-aligned prefix only; the
        # (<1024-element) tail is added below.  No jnp.pad copy of x / target.
        x2d = x_flat[:n_main].reshape(rows, _LANES)
        t2d = t_flat[:n_main].reshape(rows, _LANES)

    itemsize = jnp.dtype(x.dtype).itemsize
    total = _mse_sum_pallas(x2d, t2d, rows, itemsize)

    if n_main != n:
        dt = x_flat[n_main:].astype(jnp.float32) - t_flat[n_main:].astype(jnp.float32)
        total = total + jnp.sum(dt * dt)

    loss = total / jnp.float32(n)
    # ContentLoss returns the input untouched (loss is a side value).
    return x, loss


def _check(shape, key, rtol=1e-4, atol=1e-6):
    kx, kt = jax.random.split(key)
    x = jax.random.normal(kx, shape, dtype=jnp.float32)
    t = jax.random.normal(kt, shape, dtype=jnp.float32)
    out, loss = content_loss_forward(x, t)
    jax.block_until_ready(out)
    loss = jax.block_until_ready(loss)
    ref = jnp.mean((x - t) ** 2)
    assert jnp.allclose(loss, ref, rtol=rtol, atol=atol), (shape, float(loss), float(ref))
    assert jnp.array_equal(out, x), shape


if __name__ == "__main__":
    key = jax.random.PRNGKey(0)
    k0, k1, k2, k3 = jax.random.split(key, 4)

    # Primary usage: small NCHW feature map -> small-n fast path.
    _check((2, 4, 16, 16), k0)
    # Pallas path, single block.
    _check((2, 8, 96, 96), k1)
    # Pallas path, multi-step reduction (2-TensorCore split on v7x).
    _check((4, 16, 128, 128), k2)
    # Pallas path, ragged tail (+ partial-last-block masking on v5e/v6e).
    _check((1, 8, 181, 182), k3)

    print("KERNEL_OK")
</pallas_src>

<mosaic_0001>
module attributes {stable_mosaic.version = 11 : i64} {
  func.func @kernel(%arg0: i32, %arg1: memref<1152x128xf32, #tpu.memory_space<vmem>>, %arg2: memref<1152x128xf32, #tpu.memory_space<vmem>>, %arg3: memref<8x128xf32, #tpu.memory_space<vmem>>) attributes {dimension_semantics = [#tpu.dimension_semantics<arbitrary>], iteration_bounds = array<i64: 1>, scalar_prefetch = 0 : i64, scratch_operands = 0 : i64, tpu.core_type = #tpu.core_type<tc>, window_params = [{transform_indices = @transform_0, window_bounds = array<i64: 1152, 128>}, {transform_indices = @transform_1, window_bounds = array<i64: 1152, 128>}, {pipeline_mode = #tpu.pipeline_mode<synchronous>, transform_indices = @transform_2, window_bounds = array<i64: 8, 128>}]} {
    %c0 = arith.constant 0 : index
    %c0_0 = arith.constant 0 : index
    %0 = vector.load %arg1[%c0, %c0_0] : memref<1152x128xf32, #tpu.memory_space<vmem>>, vector<1152x128xf32>
    %c0_1 = arith.constant 0 : index
    %c0_2 = arith.constant 0 : index
    %1 = vector.load %arg2[%c0_1, %c0_2] : memref<1152x128xf32, #tpu.memory_space<vmem>>, vector<1152x128xf32>
    %2 = arith.subf %0, %1 : vector<1152x128xf32>
    %3 = arith.mulf %2, %2 : vector<1152x128xf32>
    %4 = vector.shape_cast %3 : vector<1152x128xf32> to vector<144x8x128xf32>
    %cst = arith.constant dense<0.000000e+00> : vector<8x128xf32>
    %5 = vector.multi_reduction <add>, %4, %cst [0] : vector<144x8x128xf32> to vector<8x128xf32>
    %c0_i32 = arith.constant 0 : i32
    %6 = arith.cmpi eq, %arg0, %c0_i32 : i32
    %7 = arith.extui %6 : i1 to i32
    %c0_i32_3 = arith.constant 0 : i32
    %8 = arith.cmpi ne, %7, %c0_i32_3 : i32
    scf.if %8 {
      %c0_6 = arith.constant 0 : index
      %c0_7 = arith.constant 0 : index
      %12 = vector.load %arg3[%c0_6, %c0_7] : memref<8x128xf32, #tpu.memory_space<vmem>>, vector<8x128xf32>
      tpu.vector_store %arg3[%c0_6, %c0_7], %5 {strides = array<i32>} : memref<8x128xf32, #tpu.memory_space<vmem>>, vector<8x128xf32>,
    } else {
    }
    %c0_i32_4 = arith.constant 0 : i32
    %9 = arith.cmpi ne, %arg0, %c0_i32_4 : i32
    %10 = arith.extui %9 : i1 to i32
    %c0_i32_5 = arith.constant 0 : i32
    %11 = arith.cmpi ne, %10, %c0_i32_5 : i32
    scf.if %11 {
      %c0_6 = arith.constant 0 : index
      %c0_7 = arith.constant 0 : index
      %12 = vector.load %arg3[%c0_6, %c0_7] : memref<8x128xf32, #tpu.memory_space<vmem>>, vector<8x128xf32>
      %13 = arith.addf %12, %5 : vector<8x128xf32>
      %c0_8 = arith.constant 0 : index
      %c0_9 = arith.constant 0 : index
      %14 = vector.load %arg3[%c0_8, %c0_9] : memref<8x128xf32, #tpu.memory_space<vmem>>, vector<8x128xf32>
      tpu.vector_store %arg3[%c0_8, %c0_9], %13 {strides = array<i32>} : memref<8x128xf32, #tpu.memory_space<vmem>>, vector<8x128xf32>,
    } else {
    }
    return
  }
  func.func @transform_0(%arg0: i32) -> (i32, i32) {
    %c0_i32 = arith.constant 0 : i32
    %c0_i32_0 = arith.constant 0 : i32
    return %arg0, %c0_i32 : i32, i32
  }
  func.func @transform_1(%arg0: i32) -> (i32, i32) {
    %c0_i32 = arith.constant 0 : i32
    %c0_i32_0 = arith.constant 0 : i32
    return %arg0, %c0_i32 : i32, i32
  }
  func.func @transform_2(%arg0: i32) -> (i32, i32) {
    %c0_i32 = arith.constant 0 : i32
    %c0_i32_0 = arith.constant 0 : i32
    %c0_i32_1 = arith.constant 0 : i32
    return %c0_i32, %c0_i32_0 : i32, i32
  }
}

</mosaic_0001>

<llo_original>
// kernel: tpu_custom_call.1
$region0: #{tpu_custom_call.1}
  #allocation0 [shape = 'u32[]', space=smem, size = 0x4, offset = 0x4, fixed_abs, tag = 'smem constant byte address 0x4 - core index']
  #allocation1 [shape = 'u32[144,128]{1,0:T(1,128)}', space=vmem, size = 0x12000, scoped, tag = 'internal scratch']
  %s0 = inlined_call_operand.hbm [shape: f32[1152,128], index: 0, kind: input, shape index: {}]
  %s1 = inlined_call_operand.hbm [shape: f32[1152,128], index: 1, kind: input, shape index: {}]
  %s2 = inlined_call_operand.hbm [shape: f32[8,128], index: 2, kind: output, shape index: {}]
  %s3 = sld [smem:[#allocation0]]
  $region34: #{tpu_custom_call.1} parent=0
    _
  %s5 = ssub.s32 1, %s3
  %s6 = scalar_select 0, %s5, %s3
  $region1: #{tpu_custom_call.1} parent=0
    #allocation2 [shape = 'u8[589824]{0}', space=vmem, size = 0x90000, scoped, tag = 'input window, operand 0, single buffered']
    #allocation3 [shape = 's32[1]{0}', space=sflag, size = 0x4, scoped, tag = 'scoped memory for tpu_custom_call.1']
    #allocation4 [shape = 's32[1]{0}', space=sflag, size = 0x4, scoped, tag = 'scoped memory for tpu_custom_call.1']
    #allocation5 [shape = 'u8[589824]{0}', space=vmem, size = 0x90000, scoped, tag = 'input window, operand 1, single buffered']
    #allocation6 [shape = 's32[1]{0}', space=sflag, size = 0x4, scoped, tag = 'scoped memory for tpu_custom_call.1']
    #allocation7 [shape = 'u8[4096]{0}', space=vmem, size = 0x1000, scoped, tag = 'output window, operand 0, single buffered']
    %7 = vsyncpa [#allocation3], 0
    %8 = vsyncpa [#allocation6], 0
    %9 = vsyncpa [#allocation4], 0
    // Predicated region
    $region2: #{tpu_custom_call.1} parent=1 // pred_check
      _
    $region3: #{tpu_custom_call.1} parent=1 // pred_check_branch
      %11 = sbr.rel (0) target = $region5
    $region4: #{tpu_custom_call.1} parent=1 // pred_region
      %s13 = ssub.s32 18432, 18432
      %14 = vsyncadd [#allocation3], %s13
      %s15 = sshll.u32 [#allocation2], 4
      %s16 = int_to_ptr.vmem [resolvable:$true] %s15
      %21 = dma.hbm_to_vmem [thread:$0]  %s0, 18432, %s16, [#allocation3], 128, 128, 8
    $region5: #{tpu_custom_call.1} parent=1 // pred_fallthru
      _
    // Predicated region
    $region6: #{tpu_custom_call.1} parent=1 // pred_check
      _
    $region7: #{tpu_custom_call.1} parent=1 // pred_check_branch
      %23 = sbr.rel (0) target = $region9
    $region8: #{tpu_custom_call.1} parent=1 // pred_region
      %s25 = ssub.s32 18432, 18432
      %26 = vsyncadd [#allocation6], %s25
      %s27 = sshll.u32 [#allocation5], 4
      %s28 = int_to_ptr.vmem [resolvable:$true] %s27
      %33 = dma.hbm_to_vmem [thread:$0]  %s1, 18432, %s28, [#allocation6], 128, 128, 8
    $region9: #{tpu_custom_call.1} parent=1 // pred_fallthru
      _
    // Predicated region
    $region10: #{tpu_custom_call.1} parent=1 // pred_check
      _
    $region11: #{tpu_custom_call.1} parent=1 // pred_check_branch
      %35 = sbr.rel (0) target = $region13
    $region12: #{tpu_custom_call.1} parent=1 // pred_region
      %36 = dma.done [#allocation3], 18432
    $region13: #{tpu_custom_call.1} parent=1 // pred_fallthru
      _
    // Predicated region
    $region14: #{tpu_custom_call.1} parent=1 // pred_check
      _
    $region15: #{tpu_custom_call.1} parent=1 // pred_check_branch
      %38 = sbr.rel (0) target = $region17
    $region16: #{tpu_custom_call.1} parent=1 // pred_region
      %39 = dma.done [#allocation6], 18432
    $region17: #{tpu_custom_call.1} parent=1 // pred_fallthru
      _
    %v40 = vld [vmem:[#allocation2] sm:$0xff]
    %v41 = vld [vmem:[#allocation2 + $0x8] sm:$0xff]
    %v42 = vld [vmem:[#allocation2 + $0x10] sm:$0xff]
    %v43 = vld [vmem:[#allocation2 + $0x18] sm:$0xff]
    %v44 = vld [vmem:[#allocation2 + $0x20] sm:$0xff]
    %v45 = vld [vmem:[#allocation2 + $0x28] sm:$0xff]
    %v46 = vld [vmem:[#allocation2 + $0x30] sm:$0xff]
    %v47 = vld [vmem:[#allocation2 + $0x38] sm:$0xff]
    %v48 = vld [vmem:[#allocation2 + $0x40] sm:$0xff]
    %v49 = vld [vmem:[#allocation2 + $0x48] sm:$0xff]
    %v50 = vld [vmem:[#allocation2 + $0x50] sm:$0xff]
    %v51 = vld [vmem:[#allocation2 + $0x58] sm:$0xff]
    %v52 = vld [vmem:[#allocation2 + $0x60] sm:$0xff]
    %v53 = vld [vmem:[#allocation2 + $0x68] sm:$0xff]
    %v54 = vld [vmem:[#allocation2 + $0x70] sm:$0xff]
    %v55 = vld [vmem:[#allocation2 + $0x78] sm:$0xff]
    %v56 = vld [vmem:[#allocation2 + $0x80] sm:$0xff]
    %v57 = vld [vmem:[#allocation2 + $0x88] sm:$0xff]
    %v58 = vld [vmem:[#allocation2 + $0x90] sm:$0xff]
    %v59 = vld [vmem:[#allocation2 + $0x98] sm:$0xff]
    %v60 = vld [vmem:[#allocation2 + $0xa0] sm:$0xff]
    %v61 = vld [vmem:[#allocation2 + $0xa8] sm:$0xff]
    %v62 = vld [vmem:[#allocation2 + $0xb0] sm:$0xff]
    %v63 = vld [vmem:[#allocation2 + $0xb8] sm:$0xff]
    %v64 = vld [vmem:[#allocation2 + $0xc0] sm:$0xff]
    %v65 = vld [vmem:[#allocation2 + $0xc8] sm:$0xff]
    %v66 = vld [vmem:[#allocation2 + $0xd0] sm:$0xff]
    %v67 = vld [vmem:[#allocation2 + $0xd8] sm:$0xff]
    %v68 = vld [vmem:[#allocation2 + $0xe0] sm:$0xff]
    %v69 = vld [vmem:[#allocation2 + $0xe8] sm:$0xff]
    %v70 = vld [vmem:[#allocation2 + $0xf0] sm:$0xff]
    %v71 = vld [vmem:[#allocation2 + $0xf8] sm:$0xff]
    %v72 = vld [vmem:[#allocation2 + $0x100] sm:$0xff]
    %v73 = vld [vmem:[#allocation2 + $0x108] sm:$0xff]
    %v74 = vld [vmem:[#allocation2 + $0x110] sm:$0xff]
    %v75 = vld [vmem:[#allocation2 + $0x118] sm:$0xff]
    %v76 = vld [vmem:[#allocation2 + $0x120] sm:$0xff]
    %v77 = vld [vmem:[#allocation2 + $0x128] sm:$0xff]
    %v78 = vld [vmem:[#allocation2 + $0x130] sm:$0xff]
    %v79 = vld [vmem:[#allocation2 + $0x138] sm:$0xff]
    %v80 = vld [vmem:[#allocation2 + $0x140] sm:$0xff]
    %v81 = vld [vmem:[#allocation2 + $0x148] sm:$0xff]
    %v82 = vld [vmem:[#allocation2 + $0x150] sm:$0xff]
    %v83 = vld [vmem:[#allocation2 + $0x158] sm:$0xff]
    %v84 = vld [vmem:[#allocation2 + $0x160] sm:$0xff]
    %v85 = vld [vmem:[#allocation2 + $0x168] sm:$0xff]
    %v86 = vld [vmem:[#allocation2 + $0x170] sm:$0xff]
    %v87 = vld [vmem:[#allocation2 + $0x178] sm:$0xff]
    %v88 = vld [vmem:[#allocation2 + $0x180] sm:$0xff]
    %v89 = vld [vmem:[#allocation2 + $0x188] sm:$0xff]
    %v90 = vld [vmem:[#allocation2 + $0x190] sm:$0xff]
    %v91 = vld [vmem:[#allocation2 + $0x198] sm:$0xff]
    %v92 = vld [vmem:[#allocation2 + $0x1a0] sm:$0xff]
    %v93 = vld [vmem:[#allocation2 + $0x1a8] sm:$0xff]
    %v94 = vld [vmem:[#allocation2 + $0x1b0] sm:$0xff]
    %v95 = vld [vmem:[#allocation2 + $0x1b8] sm:$0xff]
    %v96 = vld [vmem:[#allocation2 + $0x1c0] sm:$0xff]
    %v97 = vld [vmem:[#allocation2 + $0x1c8] sm:$0xff]
    %v98 = vld [vmem:[#allocation2 + $0x1d0] sm:$0xff]
    %v99 = vld [vmem:[#allocation2 + $0x1d8] sm:$0xff]
    %v100 = vld [vmem:[#allocation2 + $0x1e0] sm:$0xff]
    %v101 = vld [vmem:[#allocation2 + $0x1e8] sm:$0xff]
    %v102 = vld [vmem:[#allocation2 + $0x1f0] sm:$0xff]
    %v103 = vld [vmem:[#allocation2 + $0x1f8] sm:$0xff]
    %v104 = vld [vmem:[#allocation2 + $0x200] sm:$0xff]
    %v105 = vld [vmem:[#allocation2 + $0x208] sm:$0xff]
    %v106 = vld [vmem:[#allocation2 + $0x210] sm:$0xff]
    %v107 = vld [vmem:[#allocation2 + $0x218] sm:$0xff]
    %v108 = vld [vmem:[#allocation2 + $0x220] sm:$0xff]
    %v109 = vld [vmem:[#allocation2 + $0x228] sm:$0xff]
    %v110 = vld [vmem:[#allocation2 + $0x230] sm:$0xff]
    %v111 = vld [vmem:[#allocation2 + $0x238] sm:$0xff]
    %v112 = vld [vmem:[#allocation2 + $0x240] sm:$0xff]
    %v113 = vld [vmem:[#allocation2 + $0x248] sm:$0xff]
    %v114 = vld [vmem:[#allocation2 + $0x250] sm:$0xff]
    %v115 = vld [vmem:[#allocation2 + $0x258] sm:$0xff]
    %v116 = vld [vmem:[#allocation2 + $0x260] sm:$0xff]
    %v117 = vld [vmem:[#allocation2 + $0x268] sm:$0xff]
    %v118 = vld [vmem:[#allocation2 + $0x270] sm:$0xff]
    %v119 = vld [vmem:[#allocation2 + $0x278] sm:$0xff]
    %v120 = vld [vmem:[#allocation2 + $0x280] sm:$0xff]
    %v121 = vld [vmem:[#allocation2 + $0x288] sm:$0xff]
    %v122 = vld [vmem:[#allocation2 + $0x290] sm:$0xff]
    %v123 = vld [vmem:[#allocation2 + $0x298] sm:$0xff]
    %v124 = vld [vmem:[#allocation2 + $0x2a0] sm:$0xff]
    %v125 = vld [vmem:[#allocation2 + $0x2a8] sm:$0xff]
    %v126 = vld [vmem:[#allocation2 + $0x2b0] sm:$0xff]
    %v127 = vld [vmem:[#allocation2 + $0x2b8] sm:$0xff]
    %v128 = vld [vmem:[#allocation2 + $0x2c0] sm:$0xff]
    %v129 = vld [vmem:[#allocation2 + $0x2c8] sm:$0xff]
    %v130 = vld [vmem:[#allocation2 + $0x2d0] sm:$0xff]
    %v131 = vld [vmem:[#allocation2 + $0x2d8] sm:$0xff]
    %v132 = vld [vmem:[#allocation2 + $0x2e0] sm:$0xff]
    %v133 = vld [vmem:[#allocation2 + $0x2e8] sm:$0xff]
    %v134 = vld [vmem:[#allocation2 + $0x2f0] sm:$0xff]
    %v135 = vld [vmem:[#allocation2 + $0x2f8] sm:$0xff]
    %v136 = vld [vmem:[#allocation2 + $0x300] sm:$0xff]
    %v137 = vld [vmem:[#allocation2 + $0x308] sm:$0xff]
    %v138 = vld [vmem:[#allocation2 + $0x310] sm:$0xff]
    %v139 = vld [vmem:[#allocation2 + $0x318] sm:$0xff]
    %v140 = vld [vmem:[#allocation2 + $0x320] sm:$0xff]
    %v141 = vld [vmem:[#allocation2 + $0x328] sm:$0xff]
    %v142 = vld [vmem:[#allocation2 + $0x330] sm:$0xff]
    %v143 = vld [vmem:[#allocation2 + $0x338] sm:$0xff]
    %v144 = vld [vmem:[#allocation2 + $0x340] sm:$0xff]
    %v145 = vld [vmem:[#allocation2 + $0x348] sm:$0xff]
    %v146 = vld [vmem:[#allocation2 + $0x350] sm:$0xff]
    %v147 = vld [vmem:[#allocation2 + $0x358] sm:$0xff]
    %v148 = vld [vmem:[#allocation2 + $0x360] sm:$0xff]
    %v149 = vld [vmem:[#allocation2 + $0x368] sm:$0xff]
    %v150 = vld [vmem:[#allocation2 + $0x370] sm:$0xff]
    %v151 = vld [vmem:[#allocation2 + $0x378] sm:$0xff]
    %v152 = vld [vmem:[#allocation2 + $0x380] sm:$0xff]
    %v153 = vld [vmem:[#allocation2 + $0x388] sm:$0xff]
    %v154 = vld [vmem:[#allocation2 + $0x390] sm:$0xff]
    %v155 = vld [vmem:[#allocation2 + $0x398] sm:$0xff]
    %v156 = vld [vmem:[#allocation2 + $0x3a0] sm:$0xff]
    %v157 = vld [vmem:[#allocation2 + $0x3a8] sm:$0xff]
    %v158 = vld [vmem:[#allocation2 + $0x3b0] sm:$0xff]
    %v159 = vld [vmem:[#allocation2 + $0x3b8] sm:$0xff]
    %v160 = vld [vmem:[#allocation2 + $0x3c0] sm:$0xff]
    %v161 = vld [vmem:[#allocation2 + $0x3c8] sm:$0xff]
    %v162 = vld [vmem:[#allocation2 + $0x3d0] sm:$0xff]
    %v163 = vld [vmem:[#allocation2 + $0x3d8] sm:$0xff]
    %v164 = vld [vmem:[#allocation2 + $0x3e0] sm:$0xff]
    %v165 = vld [vmem:[#allocation2 + $0x3e8] sm:$0xff]
    %v166 = vld [vmem:[#allocation2 + $0x3f0] sm:$0xff]
    %v167 = vld [vmem:[#allocation2 + $0x3f8] sm:$0xff]
    %v168 = vld [vmem:[#allocation2 + $0x400] sm:$0xff]
    %v169 = vld [vmem:[#allocation2 + $0x408] sm:$0xff]
    %v170 = vld [vmem:[#allocation2 + $0x410] sm:$0xff]
    %v171 = vld [vmem:[#allocation2 + $0x418] sm:$0xff]
    %v172 = vld [vmem:[#allocation2 + $0x420] sm:$0xff]
    %v173 = vld [vmem:[#allocation2 + $0x428] sm:$0xff]
    %v174 = vld [vmem:[#allocation2 + $0x430] sm:$0xff]
    %v175 = vld [vmem:[#allocation2 + $0x438] sm:$0xff]
    %v176 = vld [vmem:[#allocation2 + $0x440] sm:$0xff]
    %v177 = vld [vmem:[#allocation2 + $0x448] sm:$0xff]
    %v178 = vld [vmem:[#allocation2 + $0x450] sm:$0xff]
    %v179 = vld [vmem:[#allocation2 + $0x458] sm:$0xff]
    %v180 = vld [vmem:[#allocation2 + $0x460] sm:$0xff]
    %v181 = vld [vmem:[#allocation2 + $0x468] sm:$0xff]
    %v182 = vld [vmem:[#allocation2 + $0x470] sm:$0xff]
    %v183 = vld [vmem:[#allocation2 + $0x478] sm:$0xff]
    %v184 = vld [vmem:[#allocation5] sm:$0xff]
    %v185 = vld [vmem:[#allocation5 + $0x8] sm:$0xff]
    %v186 = vld [vmem:[#allocation5 + $0x10] sm:$0xff]
    %v187 = vld [vmem:[#allocation5 + $0x18] sm:$0xff]
    %v188 = vld [vmem:[#allocation5 + $0x20] sm:$0xff]
    %v189 = vld [vmem:[#allocation5 + $0x28] sm:$0xff]
    %v190 = vld [vmem:[#allocation5 + $0x30] sm:$0xff]
    %v191 = vld [vmem:[#allocation5 + $0x38] sm:$0xff]
    %v192 = vld [vmem:[#allocation5 + $0x40] sm:$0xff]
    %v193 = vld [vmem:[#allocation5 + $0x48] sm:$0xff]
    %v194 = vld [vmem:[#allocation5 + $0x50] sm:$0xff]
    %v195 = vld [vmem:[#allocation5 + $0x58] sm:$0xff]
    %v196 = vld [vmem:[#allocation5 + $0x60] sm:$0xff]
    %v197 = vld [vmem:[#allocation5 + $0x68] sm:$0xff]
    %v198 = vld [vmem:[#allocation5 + $0x70] sm:$0xff]
    %v199 = vld [vmem:[#allocation5 + $0x78] sm:$0xff]
    %v200 = vld [vmem:[#allocation5 + $0x80] sm:$0xff]
    %v201 = vld [vmem:[#allocation5 + $0x88] sm:$0xff]
    %v202 = vld [vmem:[#allocation5 + $0x90] sm:$0xff]
    %v203 = vld [vmem:[#allocation5 + $0x98] sm:$0xff]
    %v204 = vld [vmem:[#allocation5 + $0xa0] sm:$0xff]
    %v205 = vld [vmem:[#allocation5 + $0xa8] sm:$0xff]
    %v206 = vld [vmem:[#allocation5 + $0xb0] sm:$0xff]
    %v207 = vld [vmem:[#allocation5 + $0xb8] sm:$0xff]
    %v208 = vld [vmem:[#allocation5 + $0xc0] sm:$0xff]
    %v209 = vld [vmem:[#allocation5 + $0xc8] sm:$0xff]
    %v210 = vld [vmem:[#allocation5 + $0xd0] sm:$0xff]
    %v211 = vld [vmem:[#allocation5 + $0xd8] sm:$0xff]
    %v212 = vld [vmem:[#allocation5 + $0xe0] sm:$0xff]
    %v213 = vld [vmem:[#allocation5 + $0xe8] sm:$0xff]
    %v214 = vld [vmem:[#allocation5 + $0xf0] sm:$0xff]
    %v215 = vld [vmem:[#allocation5 + $0xf8] sm:$0xff]
    %v216 = vld [vmem:[#allocation5 + $0x100] sm:$0xff]
    %v217 = vld [vmem:[#allocation5 + $0x108] sm:$0xff]
    %v218 = vld [vmem:[#allocation5 + $0x110] sm:$0xff]
    %v219 = vld [vmem:[#allocation5 + $0x118] sm:$0xff]
    %v220 = vld [vmem:[#allocation5 + $0x120] sm:$0xff]
    %v221 = vld [vmem:[#allocation5 + $0x128] sm:$0xff]
    %v222 = vld [vmem:[#allocation5 + $0x130] sm:$0xff]
    %v223 = vld [vmem:[#allocation5 + $0x138] sm:$0xff]
    %v224 = vld [vmem:[#allocation5 + $0x140] sm:$0xff]
    %v225 = vld [vmem:[#allocation5 + $0x148] sm:$0xff]
    %v226 = vld [vmem:[#allocation5 + $0x150] sm:$0xff]
    %v227 = vld [vmem:[#allocation5 + $0x158] sm:$0xff]
    %v228 = vld [vmem:[#allocation5 + $0x160] sm:$0xff]
    %v229 = vld [vmem:[#allocation5 + $0x168] sm:$0xff]
    %v230 = vld [vmem:[#allocation5 + $0x170] sm:$0xff]
    %v231 = vld [vmem:[#allocation5 + $0x178] sm:$0xff]
    %v232 = vld [vmem:[#allocation5 + $0x180] sm:$0xff]
    %v233 = vld [vmem:[#allocation5 + $0x188] sm:$0xff]
    %v234 = vld [vmem:[#allocation5 + $0x190] sm:$0xff]
    %v235 = vld [vmem:[#allocation5 + $0x198] sm:$0xff]
    %v236 = vld [vmem:[#allocation5 + $0x1a0] sm:$0xff]
    %v237 = vld [vmem:[#allocation5 + $0x1a8] sm:$0xff]
    %v238 = vld [vmem:[#allocation5 + $0x1b0] sm:$0xff]
    %v239 = vld [vmem:[#allocation5 + $0x1b8] sm:$0xff]
    %v240 = vld [vmem:[#allocation5 + $0x1c0] sm:$0xff]
    %v241 = vld [vmem:[#allocation5 + $0x1c8] sm:$0xff]
    %v242 = vld [vmem:[#allocation5 + $0x1d0] sm:$0xff]
    %v243 = vld [vmem:[#allocation5 + $0x1d8] sm:$0xff]
    %v244 = vld [vmem:[#allocation5 + $0x1e0] sm:$0xff]
    %v245 = vld [vmem:[#allocation5 + $0x1e8] sm:$0xff]
    %v246 = vld [vmem:[#allocation5 + $0x1f0] sm:$0xff]
    %v247 = vld [vmem:[#allocation5 + $0x1f8] sm:$0xff]
    %v248 = vld [vmem:[#allocation5 + $0x200] sm:$0xff]
    %v249 = vld [vmem:[#allocation5 + $0x208] sm:$0xff]
    %v250 = vld [vmem:[#allocation5 + $0x210] sm:$0xff]
    %v251 = vld [vmem:[#allocation5 + $0x218] sm:$0xff]
    %v252 = vld [vmem:[#allocation5 + $0x220] sm:$0xff]
    %v253 = vld [vmem:[#allocation5 + $0x228] sm:$0xff]
    %v254 = vld [vmem:[#allocation5 + $0x230] sm:$0xff]
    %v255 = vld [vmem:[#allocation5 + $0x238] sm:$0xff]
    %v256 = vld [vmem:[#allocation5 + $0x240] sm:$0xff]
    %v257 = vld [vmem:[#allocation5 + $0x248] sm:$0xff]
    %v258 = vld [vmem:[#allocation5 + $0x250] sm:$0xff]
    %v259 = vld [vmem:[#allocation5 + $0x258] sm:$0xff]
    %v260 = vld [vmem:[#allocation5 + $0x260] sm:$0xff]
    %v261 = vld [vmem:[#allocation5 + $0x268] sm:$0xff]
    %v262 = vld [vmem:[#allocation5 + $0x270] sm:$0xff]
    %v263 = vld [vmem:[#allocation5 + $0x278] sm:$0xff]
    %v264 = vld [vmem:[#allocation5 + $0x280] sm:$0xff]
    %v265 = vld [vmem:[#allocation5 + $0x288] sm:$0xff]
    %v266 = vld [vmem:[#allocation5 + $0x290] sm:$0xff]
    %v267 = vld [vmem:[#allocation5 + $0x298] sm:$0xff]
    %v268 = vld [vmem:[#allocation5 + $0x2a0] sm:$0xff]
    %v269 = vld [vmem:[#allocation5 + $0x2a8] sm:$0xff]
    %v270 = vld [vmem:[#allocation5 + $0x2b0] sm:$0xff]
    %v271 = vld [vmem:[#allocation5 + $0x2b8] sm:$0xff]
    %v272 = vld [vmem:[#allocation5 + $0x2c0] sm:$0xff]
    %v273 = vld [vmem:[#allocation5 + $0x2c8] sm:$0xff]
    %v274 = vld [vmem:[#allocation5 + $0x2d0] sm:$0xff]
    %v275 = vld [vmem:[#allocation5 + $0x2d8] sm:$0xff]
    %v276 = vld [vmem:[#allocation5 + $0x2e0] sm:$0xff]
    %v277 = vld [vmem:[#allocation5 + $0x2e8] sm:$0xff]
    %v278 = vld [vmem:[#allocation5 + $0x2f0] sm:$0xff]
    %v279 = vld [vmem:[#allocation5 + $0x2f8] sm:$0xff]
    %v280 = vld [vmem:[#allocation5 + $0x300] sm:$0xff]
    %v281 = vld [vmem:[#allocation5 + $0x308] sm:$0xff]
    %v282 = vld [vmem:[#allocation5 + $0x310] sm:$0xff]
    %v283 = vld [vmem:[#allocation5 + $0x318] sm:$0xff]
    %v284 = vld [vmem:[#allocation5 + $0x320] sm:$0xff]
    %v285 = vld [vmem:[#allocation5 + $0x328] sm:$0xff]
    %v286 = vld [vmem:[#allocation5 + $0x330] sm:$0xff]
    %v287 = vld [vmem:[#allocation5 + $0x338] sm:$0xff]
    %v288 = vld [vmem:[#allocation5 + $0x340] sm:$0xff]
    %v289 = vld [vmem:[#allocation5 + $0x348] sm:$0xff]
    %v290 = vld [vmem:[#allocation5 + $0x350] sm:$0xff]
    %v291 = vld [vmem:[#allocation5 + $0x358] sm:$0xff]
    %v292 = vld [vmem:[#allocation5 + $0x360] sm:$0xff]
    %v293 = vld [vmem:[#allocation5 + $0x368] sm:$0xff]
    %v294 = vld [vmem:[#allocation5 + $0x370] sm:$0xff]
    %v295 = vld [vmem:[#allocation5 + $0x378] sm:$0xff]
    %v296 = vld [vmem:[#allocation5 + $0x380] sm:$0xff]
    %v297 = vld [vmem:[#allocation5 + $0x388] sm:$0xff]
    %v298 = vld [vmem:[#allocation5 + $0x390] sm:$0xff]
    %v299 = vld [vmem:[#allocation5 + $0x398] sm:$0xff]
    %v300 = vld [vmem:[#allocation5 + $0x3a0] sm:$0xff]
    %v301 = vld [vmem:[#allocation5 + $0x3a8] sm:$0xff]
    %v302 = vld [vmem:[#allocation5 + $0x3b0] sm:$0xff]
    %v303 = vld [vmem:[#allocation5 + $0x3b8] sm:$0xff]
    %v304 = vld [vmem:[#allocation5 + $0x3c0] sm:$0xff]
    %v305 = vld [vmem:[#allocation5 + $0x3c8] sm:$0xff]
    %v306 = vld [vmem:[#allocation5 + $0x3d0] sm:$0xff]
    %v307 = vld [vmem:[#allocation5 + $0x3d8] sm:$0xff]
    %v308 = vld [vmem:[#allocation5 + $0x3e0] sm:$0xff]
    %v309 = vld [vmem:[#allocation5 + $0x3e8] sm:$0xff]
    %v310 = vld [vmem:[#allocation5 + $0x3f0] sm:$0xff]
    %v311 = vld [vmem:[#allocation5 + $0x3f8] sm:$0xff]
    %v312 = vld [vmem:[#allocation5 + $0x400] sm:$0xff]
    %v313 = vld [vmem:[#allocation5 + $0x408] sm:$0xff]
    %v314 = vld [vmem:[#allocation5 + $0x410] sm:$0xff]
    %v315 = vld [vmem:[#allocation5 + $0x418] sm:$0xff]
    %v316 = vld [vmem:[#allocation5 + $0x420] sm:$0xff]
    %v317 = vld [vmem:[#allocation5 + $0x428] sm:$0xff]
    %v318 = vld [vmem:[#allocation5 + $0x430] sm:$0xff]
    %v319 = vld [vmem:[#allocation5 + $0x438] sm:$0xff]
    %v320 = vld [vmem:[#allocation5 + $0x440] sm:$0xff]
    %v321 = vld [vmem:[#allocation5 + $0x448] sm:$0xff]
    %v322 = vld [vmem:[#allocation5 + $0x450] sm:$0xff]
    %v323 = vld [vmem:[#allocation5 + $0x458] sm:$0xff]
    %v324 = vld [vmem:[#allocation5 + $0x460] sm:$0xff]
    %v325 = vld [vmem:[#allocation5 + $0x468] sm:$0xff]
    %v326 = vld [vmem:[#allocation5 + $0x470] sm:$0xff]
    %v327 = vld [vmem:[#allocation5 + $0x478] sm:$0xff]
    %v328 = vsub.f32 %v40, %v184
    %v329 = vsub.f32 %v41, %v185
    %v330 = vsub.f32 %v42, %v186
    %v331 = vsub.f32 %v43, %v187
    %v332 = vsub.f32 %v44, %v188
    %v333 = vsub.f32 %v45, %v189
    %v334 = vsub.f32 %v46, %v190
    %v335 = vsub.f32 %v47, %v191
    %v336 = vsub.f32 %v48, %v192
    %v337 = vsub.f32 %v49, %v193
    %v338 = vsub.f32 %v50, %v194
    %v339 = vsub.f32 %v51, %v195
    %v340 = vsub.f32 %v52, %v196
    %v341 = vsub.f32 %v53, %v197
    %v342 = vsub.f32 %v54, %v198
    %v343 = vsub.f32 %v55, %v199
    %v344 = vsub.f32 %v56, %v200
    %v345 = vsub.f32 %v57, %v201
    %v346 = vsub.f32 %v58, %v202
    %v347 = vsub.f32 %v59, %v203
    %v348 = vsub.f32 %v60, %v204
    %v349 = vsub.f32 %v61, %v205
    %v350 = vsub.f32 %v62, %v206
    %v351 = vsub.f32 %v63, %v207
    %v352 = vsub.f32 %v64, %v208
    %v353 = vsub.f32 %v65, %v209
    %v354 = vsub.f32 %v66, %v210
    %v355 = vsub.f32 %v67, %v211
    %v356 = vsub.f32 %v68, %v212
    %v357 = vsub.f32 %v69, %v213
    %v358 = vsub.f32 %v70, %v214
    %v359 = vsub.f32 %v71, %v215
    %v360 = vsub.f32 %v72, %v216
    %v361 = vsub.f32 %v73, %v217
    %v362 = vsub.f32 %v74, %v218
    %v363 = vsub.f32 %v75, %v219
    %v364 = vsub.f32 %v76, %v220
    %v365 = vsub.f32 %v77, %v221
    %v366 = vsub.f32 %v78, %v222
    %v367 = vsub.f32 %v79, %v223
    %v368 = vsub.f32 %v80, %v224
    %v369 = vsub.f32 %v81, %v225
    %v370 = vsub.f32 %v82, %v226
    %v371 = vsub.f32 %v83, %v227
    %v372 = vsub.f32 %v84, %v228
    %v373 = vsub.f32 %v85, %v229
    %v374 = vsub.f32 %v86, %v230
    %v375 = vsub.f32 %v87, %v231
    %v376 = vsub.f32 %v88, %v232
    %v377 = vsub.f32 %v89, %v233
    %v378 = vsub.f32 %v90, %v234
    %v379 = vsub.f32 %v91, %v235
    %v380 = vsub.f32 %v92, %v236
    %v381 = vsub.f32 %v93, %v237
    %v382 = vsub.f32 %v94, %v238
    %v383 = vsub.f32 %v95, %v239
    %v384 = vsub.f32 %v96, %v240
    %v385 = vsub.f32 %v97, %v241
    %v386 = vsub.f32 %v98, %v242
    %v387 = vsub.f32 %v99, %v243
    %v388 = vsub.f32 %v100, %v244
    %v389 = vsub.f32 %v101, %v245
    %v390 = vsub.f32 %v102, %v246
    %v391 = vsub.f32 %v103, %v247
    %v392 = vsub.f32 %v104, %v248
    %v393 = vsub.f32 %v105, %v249
    %v394 = vsub.f32 %v106, %v250
    %v395 = vsub.f32 %v107, %v251
    %v396 = vsub.f32 %v108, %v252
    %v397 = vsub.f32 %v109, %v253
    %v398 = vsub.f32 %v110, %v254
    %v399 = vsub.f32 %v111, %v255
    %v400 = vsub.f32 %v112, %v256
    %v401 = vsub.f32 %v113, %v257
    %v402 = vsub.f32 %v114, %v258
    %v403 = vsub.f32 %v115, %v259
    %v404 = vsub.f32 %v116, %v260
    %v405 = vsub.f32 %v117, %v261
    %v406 = vsub.f32 %v118, %v262
    %v407 = vsub.f32 %v119, %v263
    %v408 = vsub.f32 %v120, %v264
    %v409 = vsub.f32 %v121, %v265
    %v410 = vsub.f32 %v122, %v266
    %v411 = vsub.f32 %v123, %v267
    %v412 = vsub.f32 %v124, %v268
    %v413 = vsub.f32 %v125, %v269
    %v414 = vsub.f32 %v126, %v270
    %v415 = vsub.f32 %v127, %v271
    %v416 = vsub.f32 %v128, %v272
    %v417 = vsub.f32 %v129, %v273
    %v418 = vsub.f32 %v130, %v274
    %v419 = vsub.f32 %v131, %v275
    %v420 = vsub.f32 %v132, %v276
    %v421 = vsub.f32 %v133, %v277
    %v422 = vsub.f32 %v134, %v278
    %v423 = vsub.f32 %v135, %v279
    %v424 = vsub.f32 %v136, %v280
    %v425 = vsub.f32 %v137, %v281
    %v426 = vsub.f32 %v138, %v282
    %v427 = vsub.f32 %v139, %v283
    %v428 = vsub.f32 %v140, %v284
    %v429 = vsub.f32 %v141, %v285
    %v430 = vsub.f32 %v142, %v286
    %v431 = vsub.f32 %v143, %v287
    %v432 = vsub.f32 %v144, %v288
    %v433 = vsub.f32 %v145, %v289
    %v434 = vsub.f32 %v146, %v290
    %v435 = vsub.f32 %v147, %v291
    %v436 = vsub.f32 %v148, %v292
    %v437 = vsub.f32 %v149, %v293
    %v438 = vsub.f32 %v150, %v294
    %v439 = vsub.f32 %v151, %v295
    %v440 = vsub.f32 %v152, %v296
    %v441 = vsub.f32 %v153, %v297
    %v442 = vsub.f32 %v154, %v298
    %v443 = vsub.f32 %v155, %v299
    %v444 = vsub.f32 %v156, %v300
    %v445 = vsub.f32 %v157, %v301
    %v446 = vsub.f32 %v158, %v302
    %v447 = vsub.f32 %v159, %v303
    %v448 = vsub.f32 %v160, %v304
    %v449 = vsub.f32 %v161, %v305
    %v450 = vsub.f32 %v162, %v306
    %v451 = vsub.f32 %v163, %v307
    %v452 = vsub.f32 %v164, %v308
    %v453 = vsub.f32 %v165, %v309
    %v454 = vsub.f32 %v166, %v310
    %v455 = vsub.f32 %v167, %v311
    %v456 = vsub.f32 %v168, %v312
    %v457 = vsub.f32 %v169, %v313
    %v458 = vsub.f32 %v170, %v314
    %v459 = vsub.f32 %v171, %v315
    %v460 = vsub.f32 %v172, %v316
    %v461 = vsub.f32 %v173, %v317
    %v462 = vsub.f32 %v174, %v318
    %v463 = vsub.f32 %v175, %v319
    %v464 = vsub.f32 %v176, %v320
    %v465 = vsub.f32 %v177, %v321
    %v466 = vsub.f32 %v178, %v322
    %v467 = vsub.f32 %v179, %v323
    %v468 = vsub.f32 %v180, %v324
    %v469 = vsub.f32 %v181, %v325
    %v470 = vsub.f32 %v182, %v326
    %v471 = vsub.f32 %v183, %v327
    %v472 = vmul.f32 %v328, %v328
    %v473 = vmul.f32 %v329, %v329
    %v474 = vmul.f32 %v330, %v330
    %v475 = vmul.f32 %v331, %v331
    %v476 = vmul.f32 %v332, %v332
    %v477 = vmul.f32 %v333, %v333
    %v478 = vmul.f32 %v334, %v334
    %v479 = vmul.f32 %v335, %v335
    %v480 = vmul.f32 %v336, %v336
    %v481 = vmul.f32 %v337, %v337
    %v482 = vmul.f32 %v338, %v338
    %v483 = vmul.f32 %v339, %v339
    %v484 = vmul.f32 %v340, %v340
    %v485 = vmul.f32 %v341, %v341
    %v486 = vmul.f32 %v342, %v342
    %v487 = vmul.f32 %v343, %v343
    %v488 = vmul.f32 %v344, %v344
    %v489 = vmul.f32 %v345, %v345
    %v490 = vmul.f32 %v346, %v346
    %v491 = vmul.f32 %v347, %v347
    %v492 = vmul.f32 %v348, %v348
    %v493 = vmul.f32 %v349, %v349
    %v494 = vmul.f32 %v350, %v350
    %v495 = vmul.f32 %v351, %v351
    %v496 = vmul.f32 %v352, %v352
    %v497 = vmul.f32 %v353, %v353
    %v498 = vmul.f32 %v354, %v354
    %v499 = vmul.f32 %v355, %v355
    %v500 = vmul.f32 %v356, %v356
    %v501 = vmul.f32 %v357, %v357
    %v502 = vmul.f32 %v358, %v358
    %v503 = vmul.f32 %v359, %v359
    %v504 = vmul.f32 %v360, %v360
    %v505 = vmul.f32 %v361, %v361
    %v506 = vmul.f32 %v362, %v362
    %v507 = vmul.f32 %v363, %v363
    %v508 = vmul.f32 %v364, %v364
    %v509 = vmul.f32 %v365, %v365
    %v510 = vmul.f32 %v366, %v366
    %v511 = vmul.f32 %v367, %v367
    %v512 = vmul.f32 %v368, %v368
    %v513 = vmul.f32 %v369, %v369
    %v514 = vmul.f32 %v370, %v370
    %v515 = vmul.f32 %v371, %v371
    %v516 = vmul.f32 %v372, %v372
    %v517 = vmul.f32 %v373, %v373
    %v518 = vmul.f32 %v374, %v374
    %v519 = vmul.f32 %v375, %v375
    %v520 = vmul.f32 %v376, %v376
    %v521 = vmul.f32 %v377, %v377
    %v522 = vmul.f32 %v378, %v378
    %v523 = vmul.f32 %v379, %v379
    %v524 = vmul.f32 %v380, %v380
    %v525 = vmul.f32 %v381, %v381
    %v526 = vmul.f32 %v382, %v382
    %v527 = vmul.f32 %v383, %v383
    %v528 = vmul.f32 %v384, %v384
    %v529 = vmul.f32 %v385, %v385
    %v530 = vmul.f32 %v386, %v386
    %v531 = vmul.f32 %v387, %v387
    %v532 = vmul.f32 %v388, %v388
    %v533 = vmul.f32 %v389, %v389
    %v534 = vmul.f32 %v390, %v390
    %v535 = vmul.f32 %v391, %v391
    %v536 = vmul.f32 %v392, %v392
    %v537 = vmul.f32 %v393, %v393
    %v538 = vmul.f32 %v394, %v394
    %v539 = vmul.f32 %v395, %v395
    %v540 = vmul.f32 %v396, %v396
    %v541 = vmul.f32 %v397, %v397
    %v542 = vmul.f32 %v398, %v398
    %v543 = vmul.f32 %v399, %v399
    %v544 = vmul.f32 %v400, %v400
    %v545 = vmul.f32 %v401, %v401
    %v546 = vmul.f32 %v402, %v402
    %v547 = vmul.f32 %v403, %v403
    %v548 = vmul.f32 %v404, %v404
    %v549 = vmul.f32 %v405, %v405
    %v550 = vmul.f32 %v406, %v406
    %v551 = vmul.f32 %v407, %v407
    %v552 = vmul.f32 %v408, %v408
    %v553 = vmul.f32 %v409, %v409
    %v554 = vmul.f32 %v410, %v410
    %v555 = vmul.f32 %v411, %v411
    %v556 = vmul.f32 %v412, %v412
    %v557 = vmul.f32 %v413, %v413
    %v558 = vmul.f32 %v414, %v414
    %v559 = vmul.f32 %v415, %v415
    %v560 = vmul.f32 %v416, %v416
    %v561 = vmul.f32 %v417, %v417
    %v562 = vmul.f32 %v418, %v418
    %v563 = vmul.f32 %v419, %v419
    %v564 = vmul.f32 %v420, %v420
    %v565 = vmul.f32 %v421, %v421
    %v566 = vmul.f32 %v422, %v422
    %v567 = vmul.f32 %v423, %v423
    %v568 = vmul.f32 %v424, %v424
    %v569 = vmul.f32 %v425, %v425
    %v570 = vmul.f32 %v426, %v426
    %v571 = vmul.f32 %v427, %v427
    %v572 = vmul.f32 %v428, %v428
    %v573 = vmul.f32 %v429, %v429
    %v574 = vmul.f32 %v430, %v430
    %v575 = vmul.f32 %v431, %v431
    %v576 = vmul.f32 %v432, %v432
    %v577 = vmul.f32 %v433, %v433
    %v578 = vmul.f32 %v434, %v434
    %v579 = vmul.f32 %v435, %v435
    %v580 = vmul.f32 %v436, %v436
    %v581 = vmul.f32 %v437, %v437
    %v582 = vmul.f32 %v438, %v438
    %v583 = vmul.f32 %v439, %v439
    %v584 = vmul.f32 %v440, %v440
    %v585 = vmul.f32 %v441, %v441
    %v586 = vmul.f32 %v442, %v442
    %v587 = vmul.f32 %v443, %v443
    %v588 = vmul.f32 %v444, %v444
    %v589 = vmul.f32 %v445, %v445
    %v590 = vmul.f32 %v446, %v446
    %v591 = vmul.f32 %v447, %v447
    %v592 = vmul.f32 %v448, %v448
    %v593 = vmul.f32 %v449, %v449
    %v594 = vmul.f32 %v450, %v450
    %v595 = vmul.f32 %v451, %v451
    %v596 = vmul.f32 %v452, %v452
    %v597 = vmul.f32 %v453, %v453
    %v598 = vmul.f32 %v454, %v454
    %v599 = vmul.f32 %v455, %v455
    %v600 = vmul.f32 %v456, %v456
    %v601 = vmul.f32 %v457, %v457
    %v602 = vmul.f32 %v458, %v458
    %v603 = vmul.f32 %v459, %v459
    %v604 = vmul.f32 %v460, %v460
    %v605 = vmul.f32 %v461, %v461
    %v606 = vmul.f32 %v462, %v462
    %v607 = vmul.f32 %v463, %v463
    %v608 = vmul.f32 %v464, %v464
    %v609 = vmul.f32 %v465, %v465
    %v610 = vmul.f32 %v466, %v466
    %v611 = vmul.f32 %v467, %v467
    %v612 = vmul.f32 %v468, %v468
    %v613 = vmul.f32 %v469, %v469
    %v614 = vmul.f32 %v470, %v470
    %v615 = vmul.f32 %v471, %v471
    %v616 = vadd.f32 %v472, %v473
    %v617 = vadd.f32 %v616, %v474
    %v618 = vadd.f32 %v617, %v475
    %v619 = vadd.f32 %v618, %v476
    %v620 = vadd.f32 %v619, %v477
    %v621 = vadd.f32 %v620, %v478
    %v622 = vadd.f32 %v621, %v479
    %v623 = vadd.f32 %v622, %v480
    %v624 = vadd.f32 %v623, %v481
    %v625 = vadd.f32 %v624, %v482
    %v626 = vadd.f32 %v625, %v483
    %v627 = vadd.f32 %v626, %v484
    %v628 = vadd.f32 %v627, %v485
    %v629 = vadd.f32 %v628, %v486
    %v630 = vadd.f32 %v629, %v487
    %v631 = vadd.f32 %v630, %v488
    %v632 = vadd.f32 %v631, %v489
    %v633 = vadd.f32 %v632, %v490
    %v634 = vadd.f32 %v633, %v491
    %v635 = vadd.f32 %v634, %v492
    %v636 = vadd.f32 %v635, %v493
    %v637 = vadd.f32 %v636, %v494
    %v638 = vadd.f32 %v637, %v495
    %v639 = vadd.f32 %v638, %v496
    %v640 = vadd.f32 %v639, %v497
    %v641 = vadd.f32 %v640, %v498
    %v642 = vadd.f32 %v641, %v499
    %v643 = vadd.f32 %v642, %v500
    %v644 = vadd.f32 %v643, %v501
    %v645 = vadd.f32 %v644, %v502
    %v646 = vadd.f32 %v645, %v503
    %v647 = vadd.f32 %v646, %v504
    %v648 = vadd.f32 %v647, %v505
    %v649 = vadd.f32 %v648, %v506
    %v650 = vadd.f32 %v649, %v507
    %v651 = vadd.f32 %v650, %v508
    %v652 = vadd.f32 %v651, %v509
    %v653 = vadd.f32 %v652, %v510
    %v654 = vadd.f32 %v653, %v511
    %v655 = vadd.f32 %v654, %v512
    %v656 = vadd.f32 %v655, %v513
    %v657 = vadd.f32 %v656, %v514
    %v658 = vadd.f32 %v657, %v515
    %v659 = vadd.f32 %v658, %v516
    %v660 = vadd.f32 %v659, %v517
    %v661 = vadd.f32 %v660, %v518
    %v662 = vadd.f32 %v661, %v519
    %v663 = vadd.f32 %v662, %v520
    %v664 = vadd.f32 %v663, %v521
    %v665 = vadd.f32 %v664, %v522
    %v666 = vadd.f32 %v665, %v523
    %v667 = vadd.f32 %v666, %v524
    %v668 = vadd.f32 %v667, %v525
    %v669 = vadd.f32 %v668, %v526
    %v670 = vadd.f32 %v669, %v527
    %v671 = vadd.f32 %v670, %v528
    %v672 = vadd.f32 %v671, %v529
    %v673 = vadd.f32 %v672, %v530
    %v674 = vadd.f32 %v673, %v531
    %v675 = vadd.f32 %v674, %v532
    %v676 = vadd.f32 %v675, %v533
    %v677 = vadd.f32 %v676, %v534
    %v678 = vadd.f32 %v677, %v535
    %v679 = vadd.f32 %v678, %v536
    %v680 = vadd.f32 %v679, %v537
    %v681 = vadd.f32 %v680, %v538
    %v682 = vadd.f32 %v681, %v539
    %v683 = vadd.f32 %v682, %v540
    %v684 = vadd.f32 %v683, %v541
    %v685 = vadd.f32 %v684, %v542
    %v686 = vadd.f32 %v685, %v543
    %v687 = vadd.f32 %v686, %v544
    %v688 = vadd.f32 %v687, %v545
    %v689 = vadd.f32 %v688, %v546
    %v690 = vadd.f32 %v689, %v547
    %v691 = vadd.f32 %v690, %v548
    %v692 = vadd.f32 %v691, %v549
    %v693 = vadd.f32 %v692, %v550
    %v694 = vadd.f32 %v693, %v551
    %v695 = vadd.f32 %v694, %v552
    %v696 = vadd.f32 %v695, %v553
    %v697 = vadd.f32 %v696, %v554
    %v698 = vadd.f32 %v697, %v555
    %v699 = vadd.f32 %v698, %v556
    %v700 = vadd.f32 %v699, %v557
    %v701 = vadd.f32 %v700, %v558
    %v702 = vadd.f32 %v701, %v559
    %v703 = vadd.f32 %v702, %v560
    %v704 = vadd.f32 %v703, %v561
    %v705 = vadd.f32 %v704, %v562
    %v706 = vadd.f32 %v705, %v563
    %v707 = vadd.f32 %v706, %v564
    %v708 = vadd.f32 %v707, %v565
    %v709 = vadd.f32 %v708, %v566
    %v710 = vadd.f32 %v709, %v567
    %v711 = vadd.f32 %v710, %v568
    %v712 = vadd.f32 %v711, %v569
    %v713 = vadd.f32 %v712, %v570
    %v714 = vadd.f32 %v713, %v571
    %v715 = vadd.f32 %v714, %v572
    %v716 = vadd.f32 %v715, %v573
    %v717 = vadd.f32 %v716, %v574
    %v718 = vadd.f32 %v717, %v575
    %v719 = vadd.f32 %v718, %v576
    %v720 = vadd.f32 %v719, %v577
    %v721 = vadd.f32 %v720, %v578
    %v722 = vadd.f32 %v721, %v579
    %v723 = vadd.f32 %v722, %v580
    %v724 = vadd.f32 %v723, %v581
    %v725 = vadd.f32 %v724, %v582
    %v726 = vadd.f32 %v725, %v583
    %v727 = vadd.f32 %v726, %v584
    %v728 = vadd.f32 %v727, %v585
    %v729 = vadd.f32 %v728, %v586
    %v730 = vadd.f32 %v729, %v587
    %v731 = vadd.f32 %v730, %v588
    %v732 = vadd.f32 %v731, %v589
    %v733 = vadd.f32 %v732, %v590
    %v734 = vadd.f32 %v733, %v591
    %v735 = vadd.f32 %v734, %v592
    %v736 = vadd.f32 %v735, %v593
    %v737 = vadd.f32 %v736, %v594
    %v738 = vadd.f32 %v737, %v595
    %v739 = vadd.f32 %v738, %v596
    %v740 = vadd.f32 %v739, %v597
    %v741 = vadd.f32 %v740, %v598
    %v742 = vadd.f32 %v741, %v599
    %v743 = vadd.f32 %v742, %v600
    %v744 = vadd.f32 %v743, %v601
    %v745 = vadd.f32 %v744, %v602
    %v746 = vadd.f32 %v745, %v603
    %v747 = vadd.f32 %v746, %v604
    %v748 = vadd.f32 %v747, %v605
    %v749 = vadd.f32 %v748, %v606
    %v750 = vadd.f32 %v749, %v607
    %v751 = vadd.f32 %v750, %v608
    %v752 = vadd.f32 %v751, %v609
    %v753 = vadd.f32 %v752, %v610
    %v754 = vadd.f32 %v753, %v611
    %v755 = vadd.f32 %v754, %v612
    %v756 = vadd.f32 %v755, %v613
    %v757 = vadd.f32 %v756, %v614
    %v758 = vadd.f32 %v757, %v615
    %p759 = scmp.eq.s32.totalorder 0, 0
    // Predicated region
    $region18: #{tpu_custom_call.1} parent=1 // pred_check
      %p760 = pneg %p759
    $region19: #{tpu_custom_call.1} parent=1 // pred_check_branch
      %762 = sbr.rel (%p760) target = $region21
    $region20: #{tpu_custom_call.1} parent=1 // pred_region
      %763 = vst [vmem:[#allocation7] sm:$0xff] %v758
    $region21: #{tpu_custom_call.1} parent=1 // pred_fallthru
      _
    %p764 = scmp.ne.s32.totalorder 0, 0
    // Predicated region
    $region22: #{tpu_custom_call.1} parent=1 // pred_check
      %p765 = pneg %p764
    $region23: #{tpu_custom_call.1} parent=1 // pred_check_branch
      %767 = sbr.rel (%p765) target = $region25
    $region24: #{tpu_custom_call.1} parent=1 // pred_region
      %v768 = vld [vmem:[#allocation7] sm:$0xff]
      %v769 = vadd.f32 %v768, %v758
      %770 = vst [vmem:[#allocation7] sm:$0xff] %v769
    $region25: #{tpu_custom_call.1} parent=1 // pred_fallthru
      _
    // Predicated region
    $region26: #{tpu_custom_call.1} parent=1 // pred_check
      _
    $region27: #{tpu_custom_call.1} parent=1 // pred_check_branch
      %772 = sbr.rel (0) target = $region29
    $region28: #{tpu_custom_call.1} parent=1 // pred_region
      %s774 = ssub.s32 128, 128
      %775 = vsyncadd [#allocation4], %s774
      %s777 = sshll.u32 [#allocation7], 4
      %s778 = int_to_ptr.vmem [resolvable:$true] %s777
      %780 = dma.vmem_to_hbm [thread:$0]  %s778, 128, %s2, [#allocation4]
    $region29: #{tpu_custom_call.1} parent=1 // pred_fallthru
      _
    // Predicated region
    $region30: #{tpu_custom_call.1} parent=1 // pred_check
      _
    $region31: #{tpu_custom_call.1} parent=1 // pred_check_branch
      %782 = sbr.rel (0) target = $region33
    $region32: #{tpu_custom_call.1} parent=1 // pred_region
      %783 = dma.done [#allocation4], 128
    $region33: #{tpu_custom_call.1} parent=1 // pred_fallthru
      _
    %784 = vsyncpa [#allocation3], 1
    %785 = vsyncpa [#allocation6], 1
    %786 = vsyncpa [#allocation4], 1

</llo_original>
